<compile_context>
chip_gen: v5e
topology: v5e:2x2
jax: 0.10.0
libtpu: 0.0.40
codegen_flags: <defaults>
</compile_context>

<pallas_src>
import functools

import jax
import jax.numpy as jnp
from jax.experimental import pallas as pl
from jax.experimental.pallas import tpu as pltpu

# Module constants (from the PyTorch file)
n_embd = 576
block_size = 192
dropout = 0.3  # eval-mode -> identity in this deterministic kernel


def head_kernel(x_ref, w_ref, o_ref, *, head_size):
    # x_ref block: (Bb, T, C) bf16
    # w_ref:       (C, 3H) bf16, fused [Wq*H^-0.5 | Wk | Wv]
    # o_ref block: (Bb, T, H) f32
    Bb, T, C = x_ref.shape
    H = head_size

    # Fused QKV projection: one lane-dense (Bb*T, C) x (C, 3H) MXU matmul,
    # bf16 operands, f32 accumulation.
    x2d = x_ref[...].reshape(Bb * T, C)
    kqv = jnp.dot(x2d, w_ref[...],
                  preferred_element_type=jnp.float32)      # (Bb*T, 3H) f32
    kqv = kqv.reshape(Bb, T, 3 * H)

    # Weight order [Wq | Wk | Wv]: q occupies lanes 0..H-1 of the first vreg,
    # v starts on a vreg boundary.  1/sqrt(H) is already folded into Wq.
    q = kqv[:, :, 0 * H:1 * H].astype(jnp.bfloat16)         # (Bb, T, H)
    k = kqv[:, :, 1 * H:2 * H].astype(jnp.bfloat16)         # (Bb, T, H)
    v = kqv[:, :, 2 * H:3 * H].astype(jnp.bfloat16)         # (Bb, T, H)

    # Batched scores without materializing k.T: bf16 operands, f32 accumulate.
    wei = jnp.einsum('bqd,bkd->bqk', q, k,
                     preferred_element_type=jnp.float32)    # (Bb, T, T)

    # Causal mask built in-kernel (VPU iota + compare; no HBM tril buffer).
    row = jax.lax.broadcasted_iota(jnp.int32, (T, T), 0)
    col = jax.lax.broadcasted_iota(jnp.int32, (T, T), 1)
    causal = (row >= col)[None, :, :]                       # (1, T, T)
    wei = jnp.where(causal, wei, jnp.float32(-1e30))        # finite neg (NaN-safe)

    # Softmax along last axis; reciprocal lands on the EUP slot.
    wei = wei - jnp.max(wei, axis=-1, keepdims=True)
    p = jnp.exp(wei)
    denom = jnp.sum(p, axis=-1, keepdims=True)
    p = p * pl.reciprocal(denom, approx=True)

    # TODO(synk): dropout implemented as eval-mode identity (training-mode
    # parity needs pltpu.prng_seed/prng_random_bits masking + 1/(1-p) rescale).

    out = jnp.einsum('bqk,bkd->bqd', p.astype(jnp.bfloat16), v,
                     preferred_element_type=jnp.float32)    # (Bb, T, H)
    o_ref[...] = out.astype(o_ref.dtype)


def prepare_fused_weight(wq, wk, wv, head_size):
    """One-time parameter transform.

    Builds the fused (C, 3H) bf16 weight [Wq * H^-0.5 | Wk | Wv] from the
    transposed nn.Linear weights (each (C, H)).  Folding the attention scale
    into the query columns removes the per-element q*scale multiply from the
    kernel; 1/sqrt(64) = 0.125 is exact, so the fold costs no precision.
    """
    scale = jnp.float32(head_size) ** jnp.float32(-0.5)
    w = jnp.concatenate([wq.astype(jnp.float32) * scale, wk, wv], axis=1)
    return w.astype(jnp.bfloat16)


def head_forward(x, w_kqv, head_size, *, batch_block=8, out_dtype=jnp.float32):
    """x: (B, T, C); w_kqv: (C, 3H) fused [Wq*scale | Wk | Wv] -> (B, T, H) f32."""
    B, T, C = x.shape
    H = head_size
    assert w_kqv.shape == (C, 3 * H)

    # Carry activations/weights as bf16 (halves HBM traffic; MXU is bf16-native).
    if x.dtype != jnp.bfloat16:
        x = x.astype(jnp.bfloat16)
    if w_kqv.dtype != jnp.bfloat16:
        w_kqv = w_kqv.astype(jnp.bfloat16)

    # Batch block: cap at B//2 so the parallel grid has >= 2 steps (shards
    # across both v7x TensorCores and enables DMA/compute overlap).
    # batch_block=8 keeps the per-step footprint well inside every chip's
    # scoped-VMEM limit at bf16; raise to 16 on v6e if desired.
    Bb = max(1, min(batch_block, B // 2 if B >= 2 else 1))
    n_steps = pl.cdiv(B, Bb)
    B_pad = n_steps * Bb
    if B_pad != B:
        # Pad the batch instead of shrinking Bb to a divisor of B: keeps the
        # tile size / projection-M stable for awkward batch sizes.
        x = jnp.pad(x, ((0, B_pad - B), (0, 0), (0, 0)))

    # Advisory cost estimate for XLA scheduling around the custom call.
    flops = B_pad * (2 * T * C * (3 * H)        # fused projection
                     + 2 * T * T * H            # q @ k^T
                     + 2 * T * T * H)           # p @ v
    transcendentals = B_pad * T * T + B_pad * T  # exp + reciprocal
    bytes_accessed = (int(x.size) + int(w_kqv.size)) * 2 \
        + B_pad * T * H * jnp.dtype(out_dtype).itemsize
    cost = pl.CostEstimate(flops=flops,
                           transcendentals=transcendentals,
                           bytes_accessed=bytes_accessed)

    kernel = functools.partial(head_kernel, head_size=H)
    out = pl.pallas_call(
        kernel,
        out_shape=jax.ShapeDtypeStruct((B_pad, T, H), out_dtype),
        grid_spec=pltpu.PrefetchScalarGridSpec(
            num_scalar_prefetch=0,
            grid=(n_steps,),
            in_specs=[
                pl.BlockSpec((Bb, T, C), lambda b: (b, 0, 0)),
                pl.BlockSpec((C, 3 * H), lambda b: (0, 0)),
            ],
            out_specs=pl.BlockSpec((Bb, T, H), lambda b: (b, 0, 0)),
        ),
        compiler_params=pltpu.CompilerParams(
            dimension_semantics=("parallel",),
            vmem_limit_bytes=32 * 1024 * 1024),
        cost_estimate=cost,
    )(x, w_kqv)

    if B_pad != B:
        out = out[:B]
    return out


def reference_forward(x, wk, wq, wv):
    """Pure-JAX f32 reference mirroring the PyTorch semantics (eval mode)."""
    T = x.shape[1]
    k = x @ wk
    q = x @ wq
    v = x @ wv
    wei = (q @ jnp.swapaxes(k, -2, -1)) * (k.shape[-1] ** -0.5)
    tril = jnp.tril(jnp.ones((block_size, block_size), dtype=jnp.float32))[:T, :T]
    wei = jnp.where(tril == 0.0, -jnp.inf, wei)
    wei = jax.nn.softmax(wei, axis=-1)
    return wei @ v


if __name__ == "__main__":
    # Small shapes: B=2, T=8 (<= block_size=192), C=n_embd=576, head_size=64
    B, T, C, H = 2, 8, n_embd, 64

    key = jax.random.PRNGKey(0)
    kx, kk, kq, kv = jax.random.split(key, 4)

    x = jax.random.normal(kx, (B, T, C), dtype=jnp.float32)
    # nn.Linear(n_embd, head_size, bias=False): weight (H, C); pass transposed (C, H)
    bound = 1.0 / (C ** 0.5)
    wk = jax.random.uniform(kk, (C, H), jnp.float32, -bound, bound)
    wq = jax.random.uniform(kq, (C, H), jnp.float32, -bound, bound)
    wv = jax.random.uniform(kv, (C, H), jnp.float32, -bound, bound)

    # One-time weight prep: fused [Wq*scale | Wk | Wv] in bf16.
    w_kqv = prepare_fused_weight(wq, wk, wv, H)

    out = head_forward(x, w_kqv, H)
    out = jax.block_until_ready(out)

    ref = reference_forward(x, wk, wq, wv)
    assert out.shape == (B, T, H)
    # Tolerance accounts for bf16 MXU operands (f32 accumulation) and the
    # approximate (EUP) reciprocal in softmax.
    assert jnp.allclose(out, ref, atol=3e-2, rtol=3e-2), float(
        jnp.max(jnp.abs(out - ref)))

    print("KERNEL_OK")
</pallas_src>

<mosaic_0001>
module attributes {stable_mosaic.version = 11 : i64} {
  func.func @head_kernel(%arg0: i32, %arg1: memref<1x8x576xbf16, #tpu.memory_space<vmem>>, %arg2: memref<576x192xbf16, #tpu.memory_space<vmem>>, %arg3: memref<1x8x64xf32, #tpu.memory_space<vmem>>) attributes {dimension_semantics = [#tpu.dimension_semantics<parallel>], iteration_bounds = array<i64: 2>, scalar_prefetch = 0 : i64, scratch_operands = 0 : i64, tpu.core_type = #tpu.core_type<tc>, window_params = [{transform_indices = @transform_0, window_bounds = array<i64: 1, 8, 576>}, {pipeline_mode = #tpu.pipeline_mode<synchronous>, transform_indices = @transform_1, window_bounds = array<i64: 576, 192>}, {transform_indices = @transform_2, window_bounds = array<i64: 1, 8, 64>}]} {
    %c0 = arith.constant 0 : index
    %c0_0 = arith.constant 0 : index
    %c0_1 = arith.constant 0 : index
    %0 = vector.load %arg1[%c0, %c0_0, %c0_1] : memref<1x8x576xbf16, #tpu.memory_space<vmem>>, vector<1x8x576xbf16>
    %1 = vector.shape_cast %0 : vector<1x8x576xbf16> to vector<8x576xbf16>
    %c0_2 = arith.constant 0 : index
    %c0_3 = arith.constant 0 : index
    %2 = vector.load %arg2[%c0_2, %c0_3] : memref<576x192xbf16, #tpu.memory_space<vmem>>, vector<576x192xbf16>
    %cst = arith.constant dense<0.000000e+00> : vector<8x192xf32>
    %3 = tpu.matmul %1, %2, %cst {dimension_numbers = #tpu.dot_dimension_numbers<[1], [0], [0], [1], [0, 0, 1, 1], [], []>} : vector<8x576xbf16>, vector<576x192xbf16>, vector<8x192xf32> -> vector<8x192xf32>
    %4 = vector.shape_cast %3 : vector<8x192xf32> to vector<1x8x192xf32>
    %5 = vector.extract_strided_slice %4 {offsets = [0, 0, 0], sizes = [1, 8, 64], strides = [1, 1, 1]} : vector<1x8x192xf32> to vector<1x8x64xf32>
    %6 = arith.truncf %5 : vector<1x8x64xf32> to vector<1x8x64xbf16>
    %7 = vector.extract_strided_slice %4 {offsets = [0, 0, 64], sizes = [1, 8, 64], strides = [1, 1, 1]} : vector<1x8x192xf32> to vector<1x8x64xf32>
    %8 = arith.truncf %7 : vector<1x8x64xf32> to vector<1x8x64xbf16>
    %9 = vector.extract_strided_slice %4 {offsets = [0, 0, 128], sizes = [1, 8, 64], strides = [1, 1, 1]} : vector<1x8x192xf32> to vector<1x8x64xf32>
    %10 = arith.truncf %9 : vector<1x8x64xf32> to vector<1x8x64xbf16>
    "tpu.trace_start"() <{level = 10 : i32, message = "bqd,bkd->bqk"}> : () -> ()
    %cst_4 = arith.constant dense<0.000000e+00> : vector<1x8x8xf32>
    %11 = tpu.matmul %6, %8, %cst_4 {dimension_numbers = #tpu.dot_dimension_numbers<[2], [2], [1], [1], [0, 0, 0, 1, 1, 1], [0], [0]>} : vector<1x8x64xbf16>, vector<1x8x64xbf16>, vector<1x8x8xf32> -> vector<1x8x8xf32>
    "tpu.trace_stop"() : () -> ()
    %12 = tpu.iota {dimensions = array<i32: 0>} : vector<8x8xi32>
    %13 = tpu.iota {dimensions = array<i32: 1>} : vector<8x8xi32>
    %14 = arith.cmpi sge, %12, %13 : vector<8x8xi32>
    %15 = vector.shape_cast %14 : vector<8x8xi1> to vector<1x8x8xi1>
    %cst_5 = arith.constant -1.000000e+30 : f32
    %16 = vector.broadcast %cst_5 : f32 to vector<1x8x8xf32>
    %17 = arith.select %15, %11, %16 : vector<1x8x8xi1>, vector<1x8x8xf32>
    %cst_6 = arith.constant dense<0xFF800000> : vector<1x8xf32>
    %18 = vector.multi_reduction <maximumf>, %17, %cst_6 [2] : vector<1x8x8xf32> to vector<1x8xf32>
    %19 = vector.shape_cast %18 : vector<1x8xf32> to vector<1x8x1xf32>
    %20 = vector.broadcast %19 : vector<1x8x1xf32> to vector<1x8x8xf32>
    %21 = arith.subf %17, %20 : vector<1x8x8xf32>
    %22 = math.exp %21 : vector<1x8x8xf32>
    %cst_7 = arith.constant dense<0.000000e+00> : vector<1x8xf32>
    %23 = vector.multi_reduction <add>, %22, %cst_7 [2] : vector<1x8x8xf32> to vector<1x8xf32>
    %24 = vector.shape_cast %23 : vector<1x8xf32> to vector<1x8x1xf32>
    %25 = tpu.reciprocal %24 {approx = true} : vector<1x8x1xf32> -> vector<1x8x1xf32>
    %26 = vector.broadcast %25 : vector<1x8x1xf32> to vector<1x8x8xf32>
    %27 = arith.mulf %22, %26 : vector<1x8x8xf32>
    %28 = arith.truncf %27 : vector<1x8x8xf32> to vector<1x8x8xbf16>
    "tpu.trace_start"() <{level = 10 : i32, message = "bqk,bkd->bqd"}> : () -> ()
    %cst_8 = arith.constant dense<0.000000e+00> : vector<1x8x64xf32>
    %29 = tpu.matmul %28, %10, %cst_8 {dimension_numbers = #tpu.dot_dimension_numbers<[2], [1], [1], [2], [0, 0, 0, 1, 1, 2], [0], [0]>} : vector<1x8x8xbf16>, vector<1x8x64xbf16>, vector<1x8x64xf32> -> vector<1x8x64xf32>
    "tpu.trace_stop"() : () -> ()
    %c0_9 = arith.constant 0 : index
    %c0_10 = arith.constant 0 : index
    %c0_11 = arith.constant 0 : index
    %30 = vector.load %arg3[%c0_9, %c0_10, %c0_11] : memref<1x8x64xf32, #tpu.memory_space<vmem>>, vector<1x8x64xf32>
    tpu.vector_store %arg3[%c0_9, %c0_10, %c0_11], %29 {strides = array<i32>} : memref<1x8x64xf32, #tpu.memory_space<vmem>>, vector<1x8x64xf32>,
    return
  }
  func.func @transform_0(%arg0: i32) -> (i32, i32, i32) {
    %c0_i32 = arith.constant 0 : i32
    %c0_i32_0 = arith.constant 0 : i32
    %c0_i32_1 = arith.constant 0 : i32
    return %arg0, %c0_i32, %c0_i32_0 : i32, i32, i32
  }
  func.func @transform_1(%arg0: i32) -> (i32, i32) {
    %c0_i32 = arith.constant 0 : i32
    %c0_i32_0 = arith.constant 0 : i32
    %c0_i32_1 = arith.constant 0 : i32
    return %c0_i32, %c0_i32_0 : i32, i32
  }
  func.func @transform_2(%arg0: i32) -> (i32, i32, i32) {
    %c0_i32 = arith.constant 0 : i32
    %c0_i32_0 = arith.constant 0 : i32
    %c0_i32_1 = arith.constant 0 : i32
    return %arg0, %c0_i32, %c0_i32_0 : i32, i32, i32
  }
}

</mosaic_0001>

<llo_original>
// kernel: tpu_custom_call.1
$region0: #{tpu_custom_call.1}
  #allocation0 [shape = 'u32[]', space=smem, size = 0x4, offset = 0x4, fixed_abs, tag = 'smem constant byte address 0x4 - core index']
  #allocation1 [shape = 'u32[72,128]{1,0:T(1,128)}', space=vmem, size = 0x9000, scoped, tag = 'internal scratch']
  %s0 = inlined_call_operand.vmem [shape: bf16[2,8,576], index: 0, kind: input, shape index: {}]
  %s1 = inlined_call_operand.vmem [shape: bf16[576,192], index: 1, kind: input, shape index: {}]
  %s2 = inlined_call_operand.hbm [shape: f32[2,8,64], index: 2, kind: output, shape index: {}]
  %s3 = sld [smem:[#allocation0]]
  $region41: #{tpu_custom_call.1} parent=0
    _
  %s5 = ssub.s32 1, %s3
  %s6 = scalar_select 0, %s5, %s3
  $region1: #{tpu_custom_call.1} parent=0
    #allocation2 [shape = 'u8[8192]{0}', space=vmem, size = 0x2000, scoped, tag = 'output window, operand 0']
    #allocation3 [shape = 's32[2]{0}', space=sflag, size = 0x8, scoped, tag = 'scoped memory for tpu_custom_call.1']
    %7 = vsyncpa [#allocation3], 0
    %s8 = scalar_lea.sflag [#allocation3], 1
    %9 = vsyncpa %s8, 0
    loop: start=0, step=1, limit=4
    $region2: #{tpu_custom_call.1} parent=1 // loop_pre_header
      _
    $region3: #{tpu_custom_call.1} parent=1 // loop_header
      %s11 = sphi 0, %s15
      %p12 = scmp.ge.s32.totalorder %s11, 4
      %s21 = sphi 0, %s23
      %s24 = sphi 0, %s21
      %s25 = sphi 0, %s24
      %s41 = sphi 0, %s25
      %s45 = sphi 0, %s45
      %s47 = sphi 0, %s45
      %s48 = sphi 0, %s47
      %s62 = sphi 0, %s48
      %s68 = sphi 0, %s70
      %s71 = sphi 0, %s68
      %s72 = sphi 0, %s71
      %s88 = sphi 0, %s72
    $region4: #{tpu_custom_call.1} parent=1 // loop_header_branch
      %14 = sbr.rel (%p12) target = $region8
    $region5: #{tpu_custom_call.1} parent=1 // loop_body
      %s16 = ssub.s32 %s11, 1
      %s17 = ssub.s32 %s11, 2
      %s18 = sadd.s32 %s11, 1
      %s19 = ssub.s32 %s11, %s18
      %p20 = scmp.eq.s32.totalorder %s19, 0
      %s22 = sadd.s32 %s21, 1
      %s23 = scalar_select %p20, %s21, %s22
      %p26 = pneg %p20
      %p27 = scmp.eq.s32.totalorder %s11, 1
      %p28 = por %p26, %p27
      %p29 = scmp.ne.s32.totalorder %s21, %s24
      %p30 = scmp.eq.s32.totalorder %s11, 0
      %p31 = por %p29, %p30
      %p32 = scmp.ne.s32.totalorder %s21, %s24
      %p33 = scmp.eq.s32.totalorder %s16, 1
      %p34 = por %p32, %p33
      %p35 = scmp.ne.s32.totalorder %s24, %s25
      %p36 = scmp.eq.s32.totalorder %s16, 0
      %p37 = por %p35, %p36
      %p38 = scmp.ne.s32.totalorder %s24, %s25
      %p39 = scmp.eq.s32.totalorder %s17, 1
      %p40 = por %p38, %p39
      %p42 = scmp.ne.s32.totalorder %s25, %s41
      %p43 = scmp.eq.s32.totalorder %s17, 0
      %p44 = por %p42, %p43
      %s46 = sadd.s32 %s45, 1
      %p49 = scmp.eq.s32.totalorder %s11, 1
      %p50 = scmp.ne.s32.totalorder %s45, %s47
      %p51 = scmp.eq.s32.totalorder %s11, 0
      %p52 = por %p50, %p51
      %p53 = scmp.ne.s32.totalorder %s45, %s47
      %p54 = scmp.eq.s32.totalorder %s16, 1
      %p55 = por %p53, %p54
      %p56 = scmp.ne.s32.totalorder %s47, %s48
      %p57 = scmp.eq.s32.totalorder %s16, 0
      %p58 = por %p56, %p57
      %p59 = scmp.ne.s32.totalorder %s47, %s48
      %p60 = scmp.eq.s32.totalorder %s17, 1
      %p61 = por %p59, %p60
      %p63 = scmp.ne.s32.totalorder %s48, %s62
      %p64 = scmp.eq.s32.totalorder %s17, 0
      %p65 = por %p63, %p64
      %s66 = ssub.s32 %s11, %s18
      %p67 = scmp.eq.s32.totalorder %s66, 0
      %s69 = sadd.s32 %s68, 1
      %s70 = scalar_select %p67, %s68, %s69
      %p73 = pneg %p67
      %p74 = scmp.eq.s32.totalorder %s11, 1
      %p75 = por %p73, %p74
      %p76 = scmp.ne.s32.totalorder %s68, %s71
      %p77 = scmp.eq.s32.totalorder %s11, 0
      %p78 = por %p76, %p77
      %p79 = scmp.ne.s32.totalorder %s68, %s71
      %p80 = scmp.eq.s32.totalorder %s16, 1
      %p81 = por %p79, %p80
      %p82 = scmp.ne.s32.totalorder %s71, %s72
      %p83 = scmp.eq.s32.totalorder %s16, 0
      %p84 = por %p82, %p83
      %p85 = scmp.ne.s32.totalorder %s71, %s72
      %p86 = scmp.eq.s32.totalorder %s17, 1
      %p87 = por %p85, %p86
      %p89 = scmp.ne.s32.totalorder %s72, %s88
      %p90 = scmp.eq.s32.totalorder %s17, 0
      %p91 = por %p89, %p90
      %p92 = scmp.le.s32.totalorder 1, %s11
      %p93 = scmp.lt.s32.totalorder %s11, 3
      %p94 = pnand %p92, %p93
      %p95 = pneg %p94
      // Predicated region
      $region9: #{tpu_custom_call.1} parent=5 // pred_check
        _
      $region10: #{tpu_custom_call.1} parent=5 // pred_check_branch
        %97 = sbr.rel (%p94) target = $region12
      $region11: #{tpu_custom_call.1} parent=5 // pred_region
        %s98 = ssub.s32 %s11, 1
        // Predicated region
        $region13: #{tpu_custom_call.1} parent=11 // pred_check
          %p99 = pneg %p58
        $region14: #{tpu_custom_call.1} parent=11 // pred_check_branch
          %101 = sbr.rel (%p99) target = $region16
        $region15: #{tpu_custom_call.1} parent=11 // pred_region
          _
        $region16: #{tpu_custom_call.1} parent=11 // pred_fallthru
          _
      $region12: #{tpu_custom_call.1} parent=5 // pred_fallthru
        _
      %p102 = scmp.lt.s32.totalorder %s11, 2
      // Predicated region
      $region17: #{tpu_custom_call.1} parent=5 // pred_check
        %p103 = pneg %p102
      $region18: #{tpu_custom_call.1} parent=5 // pred_check_branch
        %105 = sbr.rel (%p103) target = $region20
      $region19: #{tpu_custom_call.1} parent=5 // pred_region
        // Predicated region
        $region21: #{tpu_custom_call.1} parent=19 // pred_check
          %p106 = pneg %p31
        $region22: #{tpu_custom_call.1} parent=19 // pred_check_branch
          %108 = sbr.rel (%p106) target = $region24
        $region23: #{tpu_custom_call.1} parent=19 // pred_region
          %p109 = scmp.lt.s32.totalorder %s11, 1
          %s110 = scalar_select %p109, %s11, 1
          %s111 = smul.addr %s110, 5
          %s112 = smul.addr %s111, 4
          %s113 = scalar_lea.vmem %s0, %s112
        $region24: #{tpu_custom_call.1} parent=19 // pred_fallthru
          _
      $region20: #{tpu_custom_call.1} parent=5 // pred_fallthru
        _
      %p114 = scmp.le.s32.totalorder 1, %s11
      %p115 = scmp.lt.s32.totalorder %s11, 3
      %p116 = pnand %p114, %p115
      %p117 = pneg %p116
      // Predicated region
      $region25: #{tpu_custom_call.1} parent=5 // pred_check
        _
      $region26: #{tpu_custom_call.1} parent=5 // pred_check_branch
        %119 = sbr.rel (%p116) target = $region28
      $region27: #{tpu_custom_call.1} parent=5 // pred_region
        %s120 = ssub.s32 %s11, 1
        %p121 = scmp.lt.s32.totalorder %s16, 1
        %s122 = scalar_select %p121, %s16, 1
        %s123 = smul.addr %s122, 5
        %s124 = smul.addr %s123, 4
        %s125 = scalar_lea.vmem %s0, %s124
        %p126 = pneg %p37
        %p127 = pneg %p34
        %p128 = pneg %p58
        %p129 = pneg %p55
        %p130 = pneg %p84
        %p131 = pneg %p81
        %s132 = sand.u32 %s71, 1
        %s133 = scalar_lea.sflag [#allocation3], %s132
        %s134 = sand.u32 %s71, 1
        %s135 = smul.addr %s134, 8
        %s136 = scalar_lea.vmem [#allocation2], %s135
        %p137 = scmp.lt.s32.totalorder %s16, 1
        %s138 = scalar_select %p137, %s16, 1
        %s139 = smul.addr %s138, 5
        %s140 = smul.addr %s139, 4
        %s141 = scalar_lea.vmem %s0, %s140
        %v143 = vld [vmem:[%s141] sm:$0xff]
        %v144 = vld [vmem:[%s141 + $0x8] sm:$0xff]
        %v145 = vld [vmem:[%s141 + $0x10] sm:$0xf]
        %v146 = vld [vmem:[%s1] sm:$0xff]
        %v147 = vld [vmem:[%s1 + $0x8] sm:$0xff]
        %v148 = vld [vmem:[%s1 + $0x10] sm:$0xff]
        %v149 = vld [vmem:[%s1 + $0x18] sm:$0xff]
        %v150 = vld [vmem:[%s1 + $0x20] sm:$0xff]
        %v151 = vld [vmem:[%s1 + $0x28] sm:$0xff]
        %v152 = vld [vmem:[%s1 + $0x30] sm:$0xff]
        %v153 = vld [vmem:[%s1 + $0x38] sm:$0xff]
        %v154 = vld [vmem:[%s1 + $0x40] sm:$0xff]
        %v155 = vld [vmem:[%s1 + $0x48] sm:$0xff]
        %v156 = vld [vmem:[%s1 + $0x50] sm:$0xff]
        %v157 = vld [vmem:[%s1 + $0x58] sm:$0xff]
        %v158 = vld [vmem:[%s1 + $0x60] sm:$0xff]
        %v159 = vld [vmem:[%s1 + $0x68] sm:$0xff]
        %v160 = vld [vmem:[%s1 + $0x70] sm:$0xff]
        %v161 = vld [vmem:[%s1 + $0x78] sm:$0xff]
        %v162 = vld [vmem:[%s1 + $0x80] sm:$0xff]
        %v163 = vld [vmem:[%s1 + $0x88] sm:$0xff]
        %v164 = vld [vmem:[%s1 + $0x90] sm:$0xff]
        %v165 = vld [vmem:[%s1 + $0x98] sm:$0xff]
        %v166 = vld [vmem:[%s1 + $0xa0] sm:$0xff]
        %v167 = vld [vmem:[%s1 + $0xa8] sm:$0xff]
        %v168 = vld [vmem:[%s1 + $0xb0] sm:$0xff]
        %v169 = vld [vmem:[%s1 + $0xb8] sm:$0xff]
        %v170 = vld [vmem:[%s1 + $0xc0] sm:$0xff]
        %v171 = vld [vmem:[%s1 + $0xc8] sm:$0xff]
        %v172 = vld [vmem:[%s1 + $0xd0] sm:$0xff]
        %v173 = vld [vmem:[%s1 + $0xd8] sm:$0xff]
        %v174 = vld [vmem:[%s1 + $0xe0] sm:$0xff]
        %v175 = vld [vmem:[%s1 + $0xe8] sm:$0xff]
        %v176 = vld [vmem:[%s1 + $0xf0] sm:$0xff]
        %v177 = vld [vmem:[%s1 + $0xf8] sm:$0xff]
        %v178 = vld [vmem:[%s1 + $0x100] sm:$0xff]
        %v179 = vld [vmem:[%s1 + $0x108] sm:$0xff]
        %v180 = vld [vmem:[%s1 + $0x110] sm:$0xff]
        %v181 = vld [vmem:[%s1 + $0x118] sm:$0xff]
        %v182 = vld [vmem:[%s1 + $0x120] sm:$0xff]
        %v183 = vld [vmem:[%s1 + $0x128] sm:$0xff]
        %v184 = vld [vmem:[%s1 + $0x130] sm:$0xff]
        %v185 = vld [vmem:[%s1 + $0x138] sm:$0xff]
        %v186 = vld [vmem:[%s1 + $0x140] sm:$0xff]
        %v187 = vld [vmem:[%s1 + $0x148] sm:$0xff]
        %v188 = vld [vmem:[%s1 + $0x150] sm:$0xff]
        %v189 = vld [vmem:[%s1 + $0x158] sm:$0xff]
        %v190 = vld [vmem:[%s1 + $0x160] sm:$0xff]
        %v191 = vld [vmem:[%s1 + $0x168] sm:$0xff]
        %v192 = vld [vmem:[%s1 + $0x170] sm:$0xff]
        %v193 = vld [vmem:[%s1 + $0x178] sm:$0xff]
        %v194 = vld [vmem:[%s1 + $0x180] sm:$0xff]
        %v195 = vld [vmem:[%s1 + $0x188] sm:$0xff]
        %v196 = vld [vmem:[%s1 + $0x190] sm:$0xff]
        %v197 = vld [vmem:[%s1 + $0x198] sm:$0xff]
        %v198 = vld [vmem:[%s1 + $0x1a0] sm:$0xff]
        %v199 = vld [vmem:[%s1 + $0x1a8] sm:$0xff]
        %v200 = vld [vmem:[%s1 + $0x1b0] sm:$0xff]
        %v201 = vld [vmem:[%s1 + $0x1b8] sm:$0xff]
        %v202 = vld [vmem:[%s1 + $0x1c0] sm:$0xff]
        %v203 = vld [vmem:[%s1 + $0x1c8] sm:$0xff]
        %v204 = vld [vmem:[%s1 + $0x1d0] sm:$0xff]
        %v205 = vld [vmem:[%s1 + $0x1d8] sm:$0xff]
        %v206 = vld [vmem:[%s1 + $0x1e0] sm:$0xff]
        %v207 = vld [vmem:[%s1 + $0x1e8] sm:$0xff]
        %v208 = vld [vmem:[%s1 + $0x1f0] sm:$0xff]
        %v209 = vld [vmem:[%s1 + $0x1f8] sm:$0xff]
        %v210 = vld [vmem:[%s1 + $0x200] sm:$0xff]
        %v211 = vld [vmem:[%s1 + $0x208] sm:$0xff]
        %v212 = vld [vmem:[%s1 + $0x210] sm:$0xff]
        %v213 = vld [vmem:[%s1 + $0x218] sm:$0xff]
        %v214 = vld [vmem:[%s1 + $0x220] sm:$0xff]
        %v215 = vld [vmem:[%s1 + $0x228] sm:$0xff]
        %v216 = vld [vmem:[%s1 + $0x230] sm:$0xff]
        %v217 = vld [vmem:[%s1 + $0x238] sm:$0xff]
        %v221 = vunpack.c.l.b16 %v143
        %v222 = vunpack.c.h.b16 %v143
        %v223 = vunpack.c.l.b16 %v144
        %v224 = vunpack.c.h.b16 %v144
        %v225 = vunpack.c.l.b16 %v145
        %v226 = vpack.c.b16 %v221, %v221
        %v227 = vpack.c.b16 %v222, %v222
        %v228 = vpack.c.b16 %v223, %v223
        %v229 = vpack.c.b16 %v224, %v224
        %v230 = vpack.c.b16 %v225, %v225
        %v307 = vunpack.c.l.b16 %v146
        %v308 = vunpack.c.h.b16 %v146
        %v309 = vunpack.c.l.b16 %v147
        %v310 = vunpack.c.h.b16 %v147
        %v311 = vunpack.c.l.b16 %v148
        %v312 = vunpack.c.h.b16 %v148
        %v313 = vunpack.c.l.b16 %v149
        %v314 = vunpack.c.h.b16 %v149
        %v315 = vunpack.c.l.b16 %v150
        %v316 = vunpack.c.h.b16 %v150
        %v317 = vunpack.c.l.b16 %v151
        %v318 = vunpack.c.h.b16 %v151
        %v319 = vunpack.c.l.b16 %v152
        %v320 = vunpack.c.h.b16 %v152
        %v321 = vunpack.c.l.b16 %v153
        %v322 = vunpack.c.h.b16 %v153
        %v323 = vunpack.c.l.b16 %v154
        %v324 = vunpack.c.h.b16 %v154
        %v325 = vunpack.c.l.b16 %v155
        %v326 = vunpack.c.h.b16 %v155
        %v327 = vunpack.c.l.b16 %v156
        %v328 = vunpack.c.h.b16 %v156
        %v329 = vunpack.c.l.b16 %v157
        %v330 = vunpack.c.h.b16 %v157
        %v331 = vunpack.c.l.b16 %v158
        %v332 = vunpack.c.h.b16 %v158
        %v333 = vunpack.c.l.b16 %v159
        %v334 = vunpack.c.h.b16 %v159
        %v335 = vunpack.c.l.b16 %v160
        %v336 = vunpack.c.h.b16 %v160
        %v337 = vunpack.c.l.b16 %v161
        %v338 = vunpack.c.h.b16 %v161
        %v339 = vunpack.c.l.b16 %v162
        %v340 = vunpack.c.h.b16 %v162
        %v341 = vunpack.c.l.b16 %v163
        %v342 = vunpack.c.h.b16 %v163
        %v343 = vunpack.c.l.b16 %v164
        %v344 = vunpack.c.h.b16 %v164
        %v345 = vunpack.c.l.b16 %v165
        %v346 = vunpack.c.h.b16 %v165
        %v347 = vunpack.c.l.b16 %v166
        %v348 = vunpack.c.h.b16 %v166
        %v349 = vunpack.c.l.b16 %v167
        %v350 = vunpack.c.h.b16 %v167
        %v351 = vunpack.c.l.b16 %v168
        %v352 = vunpack.c.h.b16 %v168
        %v353 = vunpack.c.l.b16 %v169
        %v354 = vunpack.c.h.b16 %v169
        %v355 = vunpack.c.l.b16 %v170
        %v356 = vunpack.c.h.b16 %v170
        %v357 = vunpack.c.l.b16 %v171
        %v358 = vunpack.c.h.b16 %v171
        %v359 = vunpack.c.l.b16 %v172
        %v360 = vunpack.c.h.b16 %v172
        %v361 = vunpack.c.l.b16 %v173
        %v362 = vunpack.c.h.b16 %v173
        %v363 = vunpack.c.l.b16 %v174
        %v364 = vunpack.c.h.b16 %v174
        %v365 = vunpack.c.l.b16 %v175
        %v366 = vunpack.c.h.b16 %v175
        %v367 = vunpack.c.l.b16 %v176
        %v368 = vunpack.c.h.b16 %v176
        %v369 = vunpack.c.l.b16 %v177
        %v370 = vunpack.c.h.b16 %v177
        %v371 = vunpack.c.l.b16 %v178
        %v372 = vunpack.c.h.b16 %v178
        %v373 = vunpack.c.l.b16 %v179
        %v374 = vunpack.c.h.b16 %v179
        %v375 = vunpack.c.l.b16 %v180
        %v376 = vunpack.c.h.b16 %v180
        %v377 = vunpack.c.l.b16 %v181
        %v378 = vunpack.c.h.b16 %v181
        %v379 = vunpack.c.l.b16 %v182
        %v380 = vunpack.c.h.b16 %v182
        %v381 = vunpack.c.l.b16 %v183
        %v382 = vunpack.c.h.b16 %v183
        %v383 = vunpack.c.l.b16 %v184
        %v384 = vunpack.c.h.b16 %v184
        %v385 = vunpack.c.l.b16 %v185
        %v386 = vunpack.c.h.b16 %v185
        %v387 = vunpack.c.l.b16 %v186
        %v388 = vunpack.c.h.b16 %v186
        %v389 = vunpack.c.l.b16 %v187
        %v390 = vunpack.c.h.b16 %v187
        %v391 = vunpack.c.l.b16 %v188
        %v392 = vunpack.c.h.b16 %v188
        %v393 = vunpack.c.l.b16 %v189
        %v394 = vunpack.c.h.b16 %v189
        %v395 = vunpack.c.l.b16 %v190
        %v396 = vunpack.c.h.b16 %v190
        %v397 = vunpack.c.l.b16 %v191
        %v398 = vunpack.c.h.b16 %v191
        %v399 = vunpack.c.l.b16 %v192
        %v400 = vunpack.c.h.b16 %v192
        %v401 = vunpack.c.l.b16 %v193
        %v402 = vunpack.c.h.b16 %v193
        %v403 = vunpack.c.l.b16 %v194
        %v404 = vunpack.c.h.b16 %v194
        %v405 = vunpack.c.l.b16 %v195
        %v406 = vunpack.c.h.b16 %v195
        %v407 = vunpack.c.l.b16 %v196
        %v408 = vunpack.c.h.b16 %v196
        %v409 = vunpack.c.l.b16 %v197
        %v410 = vunpack.c.h.b16 %v197
        %v411 = vunpack.c.l.b16 %v198
        %v412 = vunpack.c.h.b16 %v198
        %v413 = vunpack.c.l.b16 %v199
        %v414 = vunpack.c.h.b16 %v199
        %v415 = vunpack.c.l.b16 %v200
        %v416 = vunpack.c.h.b16 %v200
        %v417 = vunpack.c.l.b16 %v201
        %v418 = vunpack.c.h.b16 %v201
        %v419 = vunpack.c.l.b16 %v202
        %v420 = vunpack.c.h.b16 %v202
        %v421 = vunpack.c.l.b16 %v203
        %v422 = vunpack.c.h.b16 %v203
        %v423 = vunpack.c.l.b16 %v204
        %v424 = vunpack.c.h.b16 %v204
        %v425 = vunpack.c.l.b16 %v205
        %v426 = vunpack.c.h.b16 %v205
        %v427 = vunpack.c.l.b16 %v206
        %v428 = vunpack.c.h.b16 %v206
        %v429 = vunpack.c.l.b16 %v207
        %v430 = vunpack.c.h.b16 %v207
        %v431 = vunpack.c.l.b16 %v208
        %v432 = vunpack.c.h.b16 %v208
        %v433 = vunpack.c.l.b16 %v209
        %v434 = vunpack.c.h.b16 %v209
        %v435 = vunpack.c.l.b16 %v210
        %v436 = vunpack.c.h.b16 %v210
        %v437 = vunpack.c.l.b16 %v211
        %v438 = vunpack.c.h.b16 %v211
        %v439 = vunpack.c.l.b16 %v212
        %v440 = vunpack.c.h.b16 %v212
        %v441 = vunpack.c.l.b16 %v213
        %v442 = vunpack.c.h.b16 %v213
        %v443 = vunpack.c.l.b16 %v214
        %v444 = vunpack.c.h.b16 %v214
        %v445 = vunpack.c.l.b16 %v215
        %v446 = vunpack.c.h.b16 %v215
        %v447 = vunpack.c.l.b16 %v216
        %v448 = vunpack.c.h.b16 %v216
        %v449 = vunpack.c.l.b16 %v217
        %v450 = vunpack.c.h.b16 %v217
        %v451 = vpack.c.b16 %v309, %v307
        %v452 = vpack.c.b16 %v310, %v308
        %v453 = vpack.c.b16 %v313, %v311
        %v454 = vpack.c.b16 %v314, %v312
        %v455 = vpack.c.b16 %v317, %v315
        %v456 = vpack.c.b16 %v318, %v316
        %v457 = vpack.c.b16 %v321, %v319
        %v458 = vpack.c.b16 %v322, %v320
        %v459 = vpack.c.b16 %v325, %v323
        %v460 = vpack.c.b16 %v326, %v324
        %v461 = vpack.c.b16 %v329, %v327
        %v462 = vpack.c.b16 %v330, %v328
        %v463 = vpack.c.b16 %v333, %v331
        %v464 = vpack.c.b16 %v334, %v332
        %v465 = vpack.c.b16 %v337, %v335
        %v466 = vpack.c.b16 %v338, %v336
        %v467 = vpack.c.b16 %v341, %v339
        %v468 = vpack.c.b16 %v342, %v340
        %v469 = vpack.c.b16 %v345, %v343
        %v470 = vpack.c.b16 %v346, %v344
        %v471 = vpack.c.b16 %v349, %v347
        %v472 = vpack.c.b16 %v350, %v348
        %v473 = vpack.c.b16 %v353, %v351
        %v474 = vpack.c.b16 %v354, %v352
        %v475 = vpack.c.b16 %v357, %v355
        %v476 = vpack.c.b16 %v358, %v356
        %v477 = vpack.c.b16 %v361, %v359
        %v478 = vpack.c.b16 %v362, %v360
        %v479 = vpack.c.b16 %v365, %v363
        %v480 = vpack.c.b16 %v366, %v364
        %v481 = vpack.c.b16 %v369, %v367
        %v482 = vpack.c.b16 %v370, %v368
        %v483 = vpack.c.b16 %v373, %v371
        %v484 = vpack.c.b16 %v374, %v372
        %v485 = vpack.c.b16 %v377, %v375
        %v486 = vpack.c.b16 %v378, %v376
        %v487 = vpack.c.b16 %v381, %v379
        %v488 = vpack.c.b16 %v382, %v380
        %v489 = vpack.c.b16 %v385, %v383
        %v490 = vpack.c.b16 %v386, %v384
        %v491 = vpack.c.b16 %v389, %v387
        %v492 = vpack.c.b16 %v390, %v388
        %v493 = vpack.c.b16 %v393, %v391
        %v494 = vpack.c.b16 %v394, %v392
        %v495 = vpack.c.b16 %v397, %v395
        %v496 = vpack.c.b16 %v398, %v396
        %v497 = vpack.c.b16 %v401, %v399
        %v498 = vpack.c.b16 %v402, %v400
        %v499 = vpack.c.b16 %v405, %v403
        %v500 = vpack.c.b16 %v406, %v404
        %v501 = vpack.c.b16 %v409, %v407
        %v502 = vpack.c.b16 %v410, %v408
        %v503 = vpack.c.b16 %v413, %v411
        %v504 = vpack.c.b16 %v414, %v412
        %v505 = vpack.c.b16 %v417, %v415
        %v506 = vpack.c.b16 %v418, %v416
        %v507 = vpack.c.b16 %v421, %v419
        %v508 = vpack.c.b16 %v422, %v420
        %v509 = vpack.c.b16 %v425, %v423
        %v510 = vpack.c.b16 %v426, %v424
        %v511 = vpack.c.b16 %v429, %v427
        %v512 = vpack.c.b16 %v430, %v428
        %v513 = vpack.c.b16 %v433, %v431
        %v514 = vpack.c.b16 %v434, %v432
        %v515 = vpack.c.b16 %v437, %v435
        %v516 = vpack.c.b16 %v438, %v436
        %v517 = vpack.c.b16 %v441, %v439
        %v518 = vpack.c.b16 %v442, %v440
        %v519 = vpack.c.b16 %v445, %v443
        %v520 = vpack.c.b16 %v446, %v444
        %v521 = vpack.c.b16 %v449, %v447
        %v522 = vpack.c.b16 %v450, %v448
        %vm595 = vcmask 523264
        %v597 = vsel %vm595, %v230, 0
        %599 = vmatpush.bf16.msra.mxu0 %v465
        %600 = vmatpush.bf16.msra.mxu0 %v463
        %601 = vmatpush.bf16.msra.mxu0 %v461
        %602 = vmatpush.bf16.msra.mxu0 %v459
        %603 = vmatpush.bf16.msra.mxu0 %v457
        %604 = vmatpush.bf16.msra.mxu0 %v455
        %605 = vmatpush.bf16.msra.mxu0 %v453
        %606 = vmatpush.bf16.msra.mxu0 %v451
        %607 = vmatmul.bf16.gmra.mxu0 %v226
        %v608 = vpop.f32.mrf.mxu0
        %v609 = vadd.f32 0.0, %v608
        %v610 = vpop.f32.mrf.mxu0
        %611 = vdwg.mxu0
        %612 = vmatpush.bf16.msra.mxu0 %v481
        %613 = vmatpush.bf16.msra.mxu0 %v479
        %614 = vmatpush.bf16.msra.mxu0 %v477
        %615 = vmatpush.bf16.msra.mxu0 %v475
        %616 = vmatpush.bf16.msra.mxu0 %v473
        %617 = vmatpush.bf16.msra.mxu0 %v471
        %618 = vmatpush.bf16.msra.mxu0 %v469
        %619 = vmatpush.bf16.msra.mxu0 %v467
        %620 = vmatmul.bf16.gmra.mxu0 %v227
        %v621 = vpop.f32.mrf.mxu0
        %v622 = vadd.f32 %v609, %v621
        %v623 = vpop.f32.mrf.mxu0
        %624 = vdwg.mxu0
        %625 = vmatpush.bf16.msra.mxu0 %v497
        %626 = vmatpush.bf16.msra.mxu0 %v495
        %627 = vmatpush.bf16.msra.mxu0 %v493
        %628 = vmatpush.bf16.msra.mxu0 %v491
        %629 = vmatpush.bf16.msra.mxu0 %v489
        %630 = vmatpush.bf16.msra.mxu0 %v487
        %631 = vmatpush.bf16.msra.mxu0 %v485
        %632 = vmatpush.bf16.msra.mxu0 %v483
        %633 = vmatmul.bf16.gmra.mxu0 %v228
        %v634 = vpop.f32.mrf.mxu0
        %v635 = vadd.f32 %v622, %v634
        %v636 = vpop.f32.mrf.mxu0
        %637 = vdwg.mxu0
        %638 = vmatpush.bf16.msra.mxu0 %v513
        %639 = vmatpush.bf16.msra.mxu0 %v511
        %640 = vmatpush.bf16.msra.mxu0 %v509
        %641 = vmatpush.bf16.msra.mxu0 %v507
        %642 = vmatpush.bf16.msra.mxu0 %v505
        %643 = vmatpush.bf16.msra.mxu0 %v503
        %644 = vmatpush.bf16.msra.mxu0 %v501
        %645 = vmatpush.bf16.msra.mxu0 %v499
        %646 = vmatmul.bf16.gmra.mxu0 %v229
        %v647 = vpop.f32.mrf.mxu0
        %v648 = vadd.f32 %v635, %v647
        %v649 = vpop.f32.mrf.mxu0
        %650 = vdwg.mxu0
        %651 = vmatpush.bf16.msra.mxu0 0
        %652 = vmatpush.bf16.msra.mxu0 0
        %653 = vmatpush.bf16.msra.mxu0 0
        %654 = vmatpush.bf16.msra.mxu0 0
        %655 = vmatpush.bf16.msra.mxu0 %v521
        %656 = vmatpush.bf16.msra.mxu0 %v519
        %657 = vmatpush.bf16.msra.mxu0 %v517
        %658 = vmatpush.bf16.msra.mxu0 %v515
        %659 = vmatmul.bf16.gmra.mxu0 %v597
        %v660 = vpop.f32.mrf.mxu0
        %v661 = vadd.f32 %v648, %v660
        %v662 = vpop.f32.mrf.mxu0
        %663 = vdwg.mxu0
        %664 = vmatpush.bf16.msra.mxu0 %v466
        %665 = vmatpush.bf16.msra.mxu0 %v464
        %666 = vmatpush.bf16.msra.mxu0 %v462
        %667 = vmatpush.bf16.msra.mxu0 %v460
        %668 = vmatpush.bf16.msra.mxu0 %v458
        %669 = vmatpush.bf16.msra.mxu0 %v456
        %670 = vmatpush.bf16.msra.mxu0 %v454
        %671 = vmatpush.bf16.msra.mxu0 %v452
        %672 = vmatmul.bf16.gmra.mxu0 %v226
        %v673 = vpop.f32.mrf.mxu0
        %v674 = vadd.f32 0.0, %v673
        %v675 = vpop.f32.mrf.mxu0
        %676 = vdwg.mxu0
        %677 = vmatpush.bf16.msra.mxu0 %v482
        %678 = vmatpush.bf16.msra.mxu0 %v480
        %679 = vmatpush.bf16.msra.mxu0 %v478
        %680 = vmatpush.bf16.msra.mxu0 %v476
        %681 = vmatpush.bf16.msra.mxu0 %v474
        %682 = vmatpush.bf16.msra.mxu0 %v472
        %683 = vmatpush.bf16.msra.mxu0 %v470
        %684 = vmatpush.bf16.msra.mxu0 %v468
        %685 = vmatmul.bf16.gmra.mxu0 %v227
        %v686 = vpop.f32.mrf.mxu0
        %v687 = vadd.f32 %v674, %v686
        %v688 = vpop.f32.mrf.mxu0
        %689 = vdwg.mxu0
        %690 = vmatpush.bf16.msra.mxu0 %v498
        %691 = vmatpush.bf16.msra.mxu0 %v496
        %692 = vmatpush.bf16.msra.mxu0 %v494
        %693 = vmatpush.bf16.msra.mxu0 %v492
        %694 = vmatpush.bf16.msra.mxu0 %v490
        %695 = vmatpush.bf16.msra.mxu0 %v488
        %696 = vmatpush.bf16.msra.mxu0 %v486
        %697 = vmatpush.bf16.msra.mxu0 %v484
        %698 = vmatmul.bf16.gmra.mxu0 %v228
        %v699 = vpop.f32.mrf.mxu0
        %v700 = vadd.f32 %v687, %v699
        %v701 = vpop.f32.mrf.mxu0
        %702 = vdwg.mxu0
        %703 = vmatpush.bf16.msra.mxu0 %v514
        %704 = vmatpush.bf16.msra.mxu0 %v512
        %705 = vmatpush.bf16.msra.mxu0 %v510
        %706 = vmatpush.bf16.msra.mxu0 %v508
        %707 = vmatpush.bf16.msra.mxu0 %v506
        %708 = vmatpush.bf16.msra.mxu0 %v504
        %709 = vmatpush.bf16.msra.mxu0 %v502
        %710 = vmatpush.bf16.msra.mxu0 %v500
        %711 = vmatmul.bf16.gmra.mxu0 %v229
        %v712 = vpop.f32.mrf.mxu0
        %v713 = vadd.f32 %v700, %v712
        %v714 = vpop.f32.mrf.mxu0
        %715 = vdwg.mxu0
        %716 = vmatpush.bf16.msra.mxu0 0
        %717 = vmatpush.bf16.msra.mxu0 0
        %718 = vmatpush.bf16.msra.mxu0 0
        %719 = vmatpush.bf16.msra.mxu0 0
        %720 = vmatpush.bf16.msra.mxu0 %v522
        %721 = vmatpush.bf16.msra.mxu0 %v520
        %722 = vmatpush.bf16.msra.mxu0 %v518
        %723 = vmatpush.bf16.msra.mxu0 %v516
        %724 = vmatmul.bf16.gmra.mxu0 %v597
        %v725 = vpop.f32.mrf.mxu0
        %v726 = vadd.f32 %v713, %v725
        %v727 = vpop.f32.mrf.mxu0
        %728 = vdwg.mxu0
        %v729 = vpack.c.bf16 %v661, %v661
        %v730 = vpack.c.bf16 %v726, %v726
        %v732 = vunpack.c.l.b16 %v729
        %v733 = vpack.c.b16 %v732, %v732
        %734 = vrot.lane.b32.xlu0 %v733, 64
        %v735 = vpop.permute.xlu0 %734
        %v737 = vsel %vm595, %v729, 0
        %v740 = vsel %vm595, %v735, 0
        %742 = vmatpush.bf16.xpose.msra.mxu0 0
        %743 = vmatpush.bf16.xpose.msra.mxu0 0
        %744 = vmatpush.bf16.xpose.msra.mxu0 0
        %745 = vmatpush.bf16.xpose.msra.mxu0 0
        %746 = vmatpush.bf16.xpose.msra.mxu0 0
        %747 = vmatpush.bf16.xpose.msra.mxu0 0
        %748 = vmatpush.bf16.xpose.msra.mxu0 0
        %749 = vmatpush.bf16.xpose.msra.mxu0 %v740
        %750 = vmatmul.bf16.gmra.mxu0 %v737
        %v751 = vpop.f32.mrf.mxu0
        %v752 = vadd.f32 0.0, %v751
        %v753 = vpop.f32.mrf.mxu0
        %754 = vdwg.mxu0
        %v755 = vlaneseq
        %v756 = vshrl.u32 %v755, 7
        %v757 = vlaneseq
        %v758 = vand.u32 %v757, 127
        %vm759 = vcmp.ge.s32.totalorder %v756, %v758
        %v760 = vsel %vm759, %v752, -1e+30
        %vm761 = vcmask 64512
        %v762 = vsel %vm761, %v760, -inf
        %763 = vmax.xlane.f32.xlu0 %v762
        %v764 = vpop.xlane.xlu0 %763
        %v765 = vsub.f32 %v760, %v764
        %v766 = vmul.f32 %v765, 1.442695
        %v767 = vpow.pop %v766
        %v768 = vsel %vm761, %v767, 0.0
        %769 = vadd.xlane.f32.xlu0 %v768
        %v770 = vpop.xlane.xlu0 %769
        %v771 = vrcp.pop %v770
        %v772 = vmul.f32 %v767, %v771
        %v773 = vpack.c.bf16 %v772, %v772
        %v775 = vsel %vm761, %v773, 0
        %vm777 = vcmask 1043456
        %v779 = vsel %vm777, %v730, 0
        %781 = vmatpush.bf16.msra.mxu0 0
        %782 = vmatpush.bf16.msra.mxu0 0
        %783 = vmatpush.bf16.msra.mxu0 0
        %784 = vmatpush.bf16.msra.mxu0 0
        %785 = vmatpush.bf16.msra.mxu0 0
        %786 = vmatpush.bf16.msra.mxu0 0
        %787 = vmatpush.bf16.msra.mxu0 0
        %788 = vmatpush.bf16.msra.mxu0 %v779
        %789 = vmatmul.bf16.gmra.mxu0 %v775
        %v790 = vpop.f32.mrf.mxu0
        %v791 = vadd.f32 0.0, %v790
        %v792 = vpop.f32.mrf.mxu0
        %793 = vdwg.mxu0
        %794 = vst.msk [vmem:[%s136] sm:$0xff] %vm595, %v791
        %s795 = sand.u32 %s71, 1
        %s796 = scalar_lea.sflag [#allocation3], %s795
        %s797 = sand.u32 %s71, 1
        %s798 = smul.addr %s797, 8
        %s799 = scalar_lea.vmem [#allocation2], %s798
        // Predicated region
        $region29: #{tpu_custom_call.1} parent=27 // pred_check
          %p800 = pneg %p81
        $region30: #{tpu_custom_call.1} parent=27 // pred_check_branch
          %802 = sbr.rel (%p800) target = $region32
        $region31: #{tpu_custom_call.1} parent=27 // pred_region
          %804 = vsyncadd %s796, 0
          %s805 = smul.addr %s16, 8
          %s806 = scalar_lea.hbm %s2, %s805
          %s808 = sshll.u32 %s799, 4
          %s809 = int_to_ptr.vmem [resolvable:$true] %s808
          %s810 = sshll.u32 %s806, 4
          %s811 = int_to_ptr.hbm [resolvable:$true] %s810
          %813 = dma.vmem_to_hbm [thread:$0]  %s809, 128, %s811, %s796
        $region32: #{tpu_custom_call.1} parent=27 // pred_fallthru
          _
      $region28: #{tpu_custom_call.1} parent=5 // pred_fallthru
        _
      %p814 = scmp.le.s32.totalorder 2, %s11
      // Predicated region
      $region33: #{tpu_custom_call.1} parent=5 // pred_check
        %p815 = pneg %p814
      $region34: #{tpu_custom_call.1} parent=5 // pred_check_branch
        %817 = sbr.rel (%p815) target = $region36
      $region35: #{tpu_custom_call.1} parent=5 // pred_region
        %s818 = ssub.s32 %s11, 2
        // Predicated region
        $region37: #{tpu_custom_call.1} parent=35 // pred_check
          %p819 = pneg %p87
        $region38: #{tpu_custom_call.1} parent=35 // pred_check_branch
          %821 = sbr.rel (%p819) target = $region40
        $region39: #{tpu_custom_call.1} parent=35 // pred_region
          %s822 = sand.u32 %s72, 1
          %s823 = scalar_lea.sflag [#allocation3], %s822
          %s824 = sand.u32 %s72, 1
          %s825 = smul.addr %s824, 8
          %s826 = scalar_lea.vmem [#allocation2], %s825
          %828 = dma.done %s823, 128
        $region40: #{tpu_custom_call.1} parent=35 // pred_fallthru
          _
      $region36: #{tpu_custom_call.1} parent=5 // pred_fallthru
        _
    $region6: #{tpu_custom_call.1} parent=1 // loop_footer
      %s15 = sadd.s32 1, %s11
    $region7: #{tpu_custom_call.1} parent=1 // loop_footer_branch
      %10 = sbr.rel target = $region3
    $region8: #{tpu_custom_call.1} parent=1 // loop_exit
      _
    %829 = vsyncpa [#allocation3], 1
    %s830 = scalar_lea.sflag [#allocation3], 1
    %831 = vsyncpa %s830, 1

</llo_original>
